<compile_context>
chip_gen: v7x
topology: tpu7x:2x2x1
jax: 0.10.0
libtpu: 0.0.40
codegen_flags: <defaults>
</compile_context>

<pallas_src>
import functools

import jax
import jax.numpy as jnp
from jax.experimental import pallas as pl
from jax.experimental.pallas import tpu as pltpu


def _mergenet_kernel(wspec_ref, bspec_ref, wspa_ref, bspa_ref,
                     hsi_ref, msi_ref, hsi_out_ref, msi_out_ref, *, C):
    f32 = jnp.float32
    hsi = hsi_ref[0].astype(f32)                                   # (C, P)
    msi = msi_ref[0].astype(f32)                                   # (C, P)

    # ---- spectral branch: depthwise (H*W)-window conv -> per-channel scalar ----
    # Lane reduction -> XLU; cheap relative to the elementwise work below.
    s = jnp.sum(hsi * wspec_ref[...], axis=-1, keepdims=True) + bspec_ref[...]   # (C, 1)
    # Numerically-stable softmax over the channel (sublane) axis; only C values,
    # so an exact divide (not approx reciprocal) is both cheap and bit-safer.
    s_max = jnp.max(s, axis=0, keepdims=True)
    e = jnp.exp(s - s_max)
    spe = e / jnp.sum(e, axis=0, keepdims=True)                    # (C, 1)

    x1 = msi * spe                                                 # (C, P) lane-broadcast

    # ---- spatial branch: 1x1 conv over channels + LeakyReLU(0.0) + sigmoid ----
    w_spa = wspa_ref[...]                                          # (C, C), hoisted once
    bias = jnp.broadcast_to(bspa_ref[...], hsi.shape).astype(f32)  # (C, P), hoisted once
    if C >= 64:
        # Large channel count: use the MXU for the channel contraction.
        y = jnp.dot(w_spa, msi, preferred_element_type=f32) + bias
    else:
        # Tiny channel count: keep the contraction on the VPU as statically
        # unrolled rank-1 updates (no MXU padding waste).
        y = bias
        for ci in range(C):
            y = y + w_spa[:, ci:ci + 1] * msi[ci:ci + 1, :]
    y = jnp.maximum(y, 0.0)                                        # LeakyReLU(negative_slope=0.0)
    spa = 1.0 / (1.0 + jnp.exp(-y))                                # sigmoid (exp -> EUP)

    x2 = hsi * spa                                                 # (C, P)

    # ---- fused channel concatenation: write straight into the doubled outputs ----
    out_dt = hsi_out_ref.dtype
    hsi_out_ref[0, 0:C, :] = hsi.astype(out_dt)
    hsi_out_ref[0, C:2 * C, :] = x1.astype(out_dt)
    msi_out_ref[0, 0:C, :] = msi.astype(out_dt)
    msi_out_ref[0, C:2 * C, :] = x2.astype(out_dt)


def mergenet4dsfield_forward(hsi, msi, w_spec, b_spec, w_spa, b_spa):
    """Forward pass of Mergenet4dsfield.

    hsi, msi : (B, C, H, W) float32
    w_spec   : (C, 1, H, W)  depthwise Conv2d(C, C, (H, W), groups=C) weight
    b_spec   : (C,)          its bias
    w_spa    : (C, C, 1, 1)  Conv2d(C, C, 1) weight
    b_spa    : (C,)          its bias
    returns  : (hsi_out, msi_out), each (B, 2C, H, W)
    """
    B, C, H, W = hsi.shape
    assert msi.shape == (B, C, H, W), "hsi/msi must share shape for the elementwise fusions"
    P = H * W

    # Contiguous lane-dense flattening (free reshape, no transpose / extra HBM copy).
    hsi_f = hsi.reshape(B, C, P)
    msi_f = msi.reshape(B, C, P)
    wspec_f = w_spec.reshape(C, P).astype(jnp.float32)
    bspec_f = b_spec.reshape(C, 1).astype(jnp.float32)
    wspa_f = w_spa.reshape(C, C).astype(jnp.float32)
    bspa_f = b_spa.reshape(C, 1).astype(jnp.float32)

    kernel = functools.partial(_mergenet_kernel, C=C)

    # TODO(synk): for very large C*H*W (> ~8 MiB per image) tile the lane axis P
    # with a two-pass (reduce-then-apply) grid instead of one full image per step.
    hsi_out, msi_out = pl.pallas_call(
        kernel,
        out_shape=(
            jax.ShapeDtypeStruct((B, 2 * C, P), hsi.dtype),
            jax.ShapeDtypeStruct((B, 2 * C, P), msi.dtype),
        ),
        grid=(B,),
        in_specs=[
            pl.BlockSpec((C, P), lambda b: (0, 0)),        # spectral weights (resident across grid)
            pl.BlockSpec((C, 1), lambda b: (0, 0)),        # spectral bias
            pl.BlockSpec((C, C), lambda b: (0, 0)),        # 1x1 conv weights
            pl.BlockSpec((C, 1), lambda b: (0, 0)),        # 1x1 conv bias
            pl.BlockSpec((1, C, P), lambda b: (b, 0, 0)),  # hsi[b]
            pl.BlockSpec((1, C, P), lambda b: (b, 0, 0)),  # msi[b]
        ],
        out_specs=(
            pl.BlockSpec((1, 2 * C, P), lambda b: (b, 0, 0)),
            pl.BlockSpec((1, 2 * C, P), lambda b: (b, 0, 0)),
        ),
        compiler_params=pltpu.CompilerParams(
            dimension_semantics=("parallel",),
            vmem_limit_bytes=48 * 1024 * 1024,   # < 64 MiB physical on v7x
        ),
    )(wspec_f, bspec_f, wspa_f, bspa_f, hsi_f, msi_f)

    return hsi_out.reshape(B, 2 * C, H, W), msi_out.reshape(B, 2 * C, H, W)


def _reference(hsi, msi, w_spec, b_spec, w_spa, b_spa):
    """Pure-JAX reference matching the PyTorch module."""
    s = jnp.sum(hsi * w_spec[:, 0][None], axis=(2, 3)) + b_spec[None, :]            # (B, C)
    spe = jax.nn.softmax(s, axis=1)[:, :, None, None]                               # (B, C, 1, 1)
    x1 = msi * spe
    w2 = w_spa[:, :, 0, 0]                                                           # (C_out, C_in)
    y = jnp.einsum("oc,bchw->bohw", w2, msi,
                   precision=jax.lax.Precision.HIGHEST) + b_spa[None, :, None, None]
    spa = jax.nn.sigmoid(jnp.maximum(y, 0.0))                                        # LeakyReLU(0.0) -> ReLU
    x2 = hsi * spa
    hsi_out = jnp.concatenate([hsi, x1], axis=1)
    msi_out = jnp.concatenate([msi, x2], axis=1)
    return hsi_out, msi_out


if __name__ == "__main__":
    key = jax.random.PRNGKey(0)
    k1, k2, k3, k4, k5, k6 = jax.random.split(key, 6)

    B, C, H, W = 2, 4, 16, 16

    hsi = jax.random.normal(k1, (B, C, H, W), dtype=jnp.float32)
    msi = jax.random.normal(k2, (B, C, H, W), dtype=jnp.float32)

    # Deterministic Conv2d-style init (kaiming-uniform-like bounds, fixed seed).
    # net_spectral: Conv2d(C, C, (H, W), groups=C) -> weight (C, 1, H, W), bias (C,)
    fan_spec = 1 * H * W
    bnd_spec = 1.0 / (fan_spec ** 0.5)
    w_spec = jax.random.uniform(k3, (C, 1, H, W), minval=-bnd_spec, maxval=bnd_spec,
                                dtype=jnp.float32)
    b_spec = jax.random.uniform(k4, (C,), minval=-bnd_spec, maxval=bnd_spec,
                                dtype=jnp.float32)
    # net_spatial: Conv2d(C, C, 1) -> weight (C, C, 1, 1), bias (C,)
    fan_spa = C
    bnd_spa = 1.0 / (fan_spa ** 0.5)
    w_spa = jax.random.uniform(k5, (C, C, 1, 1), minval=-bnd_spa, maxval=bnd_spa,
                               dtype=jnp.float32)
    b_spa = jax.random.uniform(k6, (C,), minval=-bnd_spa, maxval=bnd_spa,
                               dtype=jnp.float32)

    hsi_out, msi_out = mergenet4dsfield_forward(hsi, msi, w_spec, b_spec, w_spa, b_spa)
    hsi_out, msi_out = jax.block_until_ready((hsi_out, msi_out))

    ref_h, ref_m = _reference(hsi, msi, w_spec, b_spec, w_spa, b_spa)
    assert hsi_out.shape == (B, 2 * C, H, W), hsi_out.shape
    assert msi_out.shape == (B, 2 * C, H, W), msi_out.shape
    assert jnp.allclose(hsi_out, ref_h, atol=1e-4, rtol=1e-4), "hsi output mismatch vs reference"
    assert jnp.allclose(msi_out, ref_m, atol=1e-4, rtol=1e-4), "msi output mismatch vs reference"

    print("KERNEL_OK")
</pallas_src>

<mosaic_0001>
module attributes {stable_mosaic.version = 11 : i64} {
  func.func @_mergenet_kernel(%arg0: i32, %arg1: memref<4x256xf32, #tpu.memory_space<vmem>>, %arg2: memref<4x1xf32, #tpu.memory_space<vmem>>, %arg3: memref<4x4xf32, #tpu.memory_space<vmem>>, %arg4: memref<4x1xf32, #tpu.memory_space<vmem>>, %arg5: memref<1x4x256xf32, #tpu.memory_space<vmem>>, %arg6: memref<1x4x256xf32, #tpu.memory_space<vmem>>, %arg7: memref<1x8x256xf32, #tpu.memory_space<vmem>>, %arg8: memref<1x8x256xf32, #tpu.memory_space<vmem>>) attributes {dimension_semantics = [#tpu.dimension_semantics<parallel>], iteration_bounds = array<i64: 2>, scalar_prefetch = 0 : i64, scratch_operands = 0 : i64, tpu.core_type = #tpu.core_type<tc>, window_params = [{pipeline_mode = #tpu.pipeline_mode<synchronous>, transform_indices = @transform_0, window_bounds = array<i64: 4, 256>}, {pipeline_mode = #tpu.pipeline_mode<synchronous>, transform_indices = @transform_1, window_bounds = array<i64: 4, 1>}, {pipeline_mode = #tpu.pipeline_mode<synchronous>, transform_indices = @transform_2, window_bounds = array<i64: 4, 4>}, {pipeline_mode = #tpu.pipeline_mode<synchronous>, transform_indices = @transform_3, window_bounds = array<i64: 4, 1>}, {transform_indices = @transform_4, window_bounds = array<i64: 1, 4, 256>}, {transform_indices = @transform_5, window_bounds = array<i64: 1, 4, 256>}, {transform_indices = @transform_6, window_bounds = array<i64: 1, 8, 256>}, {transform_indices = @transform_7, window_bounds = array<i64: 1, 8, 256>}]} {
    %c0 = arith.constant 0 : index
    %c0_0 = arith.constant 0 : index
    %c0_1 = arith.constant 0 : index
    %0 = vector.load %arg5[%c0, %c0_0, %c0_1] : memref<1x4x256xf32, #tpu.memory_space<vmem>>, vector<1x4x256xf32>
    %1 = vector.shape_cast %0 : vector<1x4x256xf32> to vector<4x256xf32>
    %c0_2 = arith.constant 0 : index
    %c0_3 = arith.constant 0 : index
    %c0_4 = arith.constant 0 : index
    %2 = vector.load %arg6[%c0_2, %c0_3, %c0_4] : memref<1x4x256xf32, #tpu.memory_space<vmem>>, vector<1x4x256xf32>
    %3 = vector.shape_cast %2 : vector<1x4x256xf32> to vector<4x256xf32>
    %c0_5 = arith.constant 0 : index
    %c0_6 = arith.constant 0 : index
    %4 = vector.load %arg1[%c0_5, %c0_6] : memref<4x256xf32, #tpu.memory_space<vmem>>, vector<4x256xf32>
    %5 = arith.mulf %1, %4 : vector<4x256xf32>
    %cst = arith.constant dense<0.000000e+00> : vector<4xf32>
    %6 = vector.multi_reduction <add>, %5, %cst [1] : vector<4x256xf32> to vector<4xf32>
    %7 = vector.shape_cast %6 : vector<4xf32> to vector<4x1xf32>
    %c0_7 = arith.constant 0 : index
    %c0_8 = arith.constant 0 : index
    %8 = vector.load %arg2[%c0_7, %c0_8] : memref<4x1xf32, #tpu.memory_space<vmem>>, vector<4x1xf32>
    %9 = arith.addf %7, %8 : vector<4x1xf32>
    %cst_9 = arith.constant dense<0xFF800000> : vector<1xf32>
    %10 = vector.multi_reduction <maximumf>, %9, %cst_9 [0] : vector<4x1xf32> to vector<1xf32>
    %11 = vector.shape_cast %10 : vector<1xf32> to vector<1x1xf32>
    %12 = vector.broadcast %11 : vector<1x1xf32> to vector<4x1xf32>
    %13 = arith.subf %9, %12 : vector<4x1xf32>
    %14 = math.exp %13 : vector<4x1xf32>
    %cst_10 = arith.constant dense<0.000000e+00> : vector<1xf32>
    %15 = vector.multi_reduction <add>, %14, %cst_10 [0] : vector<4x1xf32> to vector<1xf32>
    %16 = vector.shape_cast %15 : vector<1xf32> to vector<1x1xf32>
    %17 = vector.broadcast %16 : vector<1x1xf32> to vector<4x1xf32>
    %18 = arith.divf %14, %17 : vector<4x1xf32>
    %19 = vector.broadcast %18 : vector<4x1xf32> to vector<4x256xf32>
    %20 = arith.mulf %3, %19 : vector<4x256xf32>
    %c0_11 = arith.constant 0 : index
    %c0_12 = arith.constant 0 : index
    %21 = vector.load %arg3[%c0_11, %c0_12] : memref<4x4xf32, #tpu.memory_space<vmem>>, vector<4x4xf32>
    %c0_13 = arith.constant 0 : index
    %c0_14 = arith.constant 0 : index
    %22 = vector.load %arg4[%c0_13, %c0_14] : memref<4x1xf32, #tpu.memory_space<vmem>>, vector<4x1xf32>
    %23 = vector.shape_cast %22 : vector<4x1xf32> to vector<4x1xf32>
    %24 = vector.broadcast %23 : vector<4x1xf32> to vector<4x256xf32>
    %25 = vector.extract_strided_slice %21 {offsets = [0, 0], sizes = [4, 1], strides = [1, 1]} : vector<4x4xf32> to vector<4x1xf32>
    %26 = vector.extract_strided_slice %3 {offsets = [0, 0], sizes = [1, 256], strides = [1, 1]} : vector<4x256xf32> to vector<1x256xf32>
    %27 = vector.broadcast %25 : vector<4x1xf32> to vector<4x256xf32>
    %28 = vector.broadcast %26 : vector<1x256xf32> to vector<4x256xf32>
    %29 = arith.mulf %27, %28 : vector<4x256xf32>
    %30 = arith.addf %24, %29 : vector<4x256xf32>
    %31 = vector.extract_strided_slice %21 {offsets = [0, 1], sizes = [4, 1], strides = [1, 1]} : vector<4x4xf32> to vector<4x1xf32>
    %32 = vector.extract_strided_slice %3 {offsets = [1, 0], sizes = [1, 256], strides = [1, 1]} : vector<4x256xf32> to vector<1x256xf32>
    %33 = vector.broadcast %31 : vector<4x1xf32> to vector<4x256xf32>
    %34 = vector.broadcast %32 : vector<1x256xf32> to vector<4x256xf32>
    %35 = arith.mulf %33, %34 : vector<4x256xf32>
    %36 = arith.addf %30, %35 : vector<4x256xf32>
    %37 = vector.extract_strided_slice %21 {offsets = [0, 2], sizes = [4, 1], strides = [1, 1]} : vector<4x4xf32> to vector<4x1xf32>
    %38 = vector.extract_strided_slice %3 {offsets = [2, 0], sizes = [1, 256], strides = [1, 1]} : vector<4x256xf32> to vector<1x256xf32>
    %39 = vector.broadcast %37 : vector<4x1xf32> to vector<4x256xf32>
    %40 = vector.broadcast %38 : vector<1x256xf32> to vector<4x256xf32>
    %41 = arith.mulf %39, %40 : vector<4x256xf32>
    %42 = arith.addf %36, %41 : vector<4x256xf32>
    %43 = vector.extract_strided_slice %21 {offsets = [0, 3], sizes = [4, 1], strides = [1, 1]} : vector<4x4xf32> to vector<4x1xf32>
    %44 = vector.extract_strided_slice %3 {offsets = [3, 0], sizes = [1, 256], strides = [1, 1]} : vector<4x256xf32> to vector<1x256xf32>
    %45 = vector.broadcast %43 : vector<4x1xf32> to vector<4x256xf32>
    %46 = vector.broadcast %44 : vector<1x256xf32> to vector<4x256xf32>
    %47 = arith.mulf %45, %46 : vector<4x256xf32>
    %48 = arith.addf %42, %47 : vector<4x256xf32>
    %cst_15 = arith.constant 0.000000e+00 : f32
    %49 = vector.broadcast %cst_15 : f32 to vector<4x256xf32>
    %50 = arith.maximumf %48, %49 : vector<4x256xf32>
    %cst_16 = arith.constant 0.000000e+00 : f32
    %51 = vector.broadcast %cst_16 : f32 to vector<4x256xf32>
    %52 = arith.subf %51, %50 : vector<4x256xf32>
    %53 = math.exp %52 : vector<4x256xf32>
    %cst_17 = arith.constant 1.000000e+00 : f32
    %54 = vector.broadcast %cst_17 : f32 to vector<4x256xf32>
    %55 = arith.addf %54, %53 : vector<4x256xf32>
    %cst_18 = arith.constant 1.000000e+00 : f32
    %56 = vector.broadcast %cst_18 : f32 to vector<4x256xf32>
    %57 = arith.divf %56, %55 : vector<4x256xf32>
    %58 = arith.mulf %1, %57 : vector<4x256xf32>
    %c0_19 = arith.constant 0 : index
    %c0_20 = arith.constant 0 : index
    %c0_21 = arith.constant 0 : index
    %59 = vector.load %arg7[%c0_19, %c0_20, %c0_21] : memref<1x8x256xf32, #tpu.memory_space<vmem>>, vector<1x4x256xf32>
    %60 = vector.shape_cast %59 : vector<1x4x256xf32> to vector<4x256xf32>
    %61 = vector.shape_cast %1 : vector<4x256xf32> to vector<1x4x256xf32>
    tpu.vector_store %arg7[%c0_19, %c0_20, %c0_21], %61 {strides = array<i32>} : memref<1x8x256xf32, #tpu.memory_space<vmem>>, vector<1x4x256xf32>,
    %c0_22 = arith.constant 0 : index
    %c4 = arith.constant 4 : index
    %c0_23 = arith.constant 0 : index
    %62 = vector.load %arg7[%c0_22, %c4, %c0_23] : memref<1x8x256xf32, #tpu.memory_space<vmem>>, vector<1x4x256xf32>
    %63 = vector.shape_cast %62 : vector<1x4x256xf32> to vector<4x256xf32>
    %64 = vector.shape_cast %20 : vector<4x256xf32> to vector<1x4x256xf32>
    tpu.vector_store %arg7[%c0_22, %c4, %c0_23], %64 {strides = array<i32>} : memref<1x8x256xf32, #tpu.memory_space<vmem>>, vector<1x4x256xf32>,
    %c0_24 = arith.constant 0 : index
    %c0_25 = arith.constant 0 : index
    %c0_26 = arith.constant 0 : index
    %65 = vector.load %arg8[%c0_24, %c0_25, %c0_26] : memref<1x8x256xf32, #tpu.memory_space<vmem>>, vector<1x4x256xf32>
    %66 = vector.shape_cast %65 : vector<1x4x256xf32> to vector<4x256xf32>
    %67 = vector.shape_cast %3 : vector<4x256xf32> to vector<1x4x256xf32>
    tpu.vector_store %arg8[%c0_24, %c0_25, %c0_26], %67 {strides = array<i32>} : memref<1x8x256xf32, #tpu.memory_space<vmem>>, vector<1x4x256xf32>,
    %c0_27 = arith.constant 0 : index
    %c4_28 = arith.constant 4 : index
    %c0_29 = arith.constant 0 : index
    %68 = vector.load %arg8[%c0_27, %c4_28, %c0_29] : memref<1x8x256xf32, #tpu.memory_space<vmem>>, vector<1x4x256xf32>
    %69 = vector.shape_cast %68 : vector<1x4x256xf32> to vector<4x256xf32>
    %70 = vector.shape_cast %58 : vector<4x256xf32> to vector<1x4x256xf32>
    tpu.vector_store %arg8[%c0_27, %c4_28, %c0_29], %70 {strides = array<i32>} : memref<1x8x256xf32, #tpu.memory_space<vmem>>, vector<1x4x256xf32>,
    return
  }
  func.func @transform_0(%arg0: i32) -> (i32, i32) {
    %c0_i32 = arith.constant 0 : i32
    %c0_i32_0 = arith.constant 0 : i32
    %c0_i32_1 = arith.constant 0 : i32
    return %c0_i32, %c0_i32_0 : i32, i32
  }
  func.func @transform_1(%arg0: i32) -> (i32, i32) {
    %c0_i32 = arith.constant 0 : i32
    %c0_i32_0 = arith.constant 0 : i32
    %c0_i32_1 = arith.constant 0 : i32
    return %c0_i32, %c0_i32_0 : i32, i32
  }
  func.func @transform_2(%arg0: i32) -> (i32, i32) {
    %c0_i32 = arith.constant 0 : i32
    %c0_i32_0 = arith.constant 0 : i32
    %c0_i32_1 = arith.constant 0 : i32
    return %c0_i32, %c0_i32_0 : i32, i32
  }
  func.func @transform_3(%arg0: i32) -> (i32, i32) {
    %c0_i32 = arith.constant 0 : i32
    %c0_i32_0 = arith.constant 0 : i32
    %c0_i32_1 = arith.constant 0 : i32
    return %c0_i32, %c0_i32_0 : i32, i32
  }
  func.func @transform_4(%arg0: i32) -> (i32, i32, i32) {
    %c0_i32 = arith.constant 0 : i32
    %c0_i32_0 = arith.constant 0 : i32
    %c0_i32_1 = arith.constant 0 : i32
    return %arg0, %c0_i32, %c0_i32_0 : i32, i32, i32
  }
  func.func @transform_5(%arg0: i32) -> (i32, i32, i32) {
    %c0_i32 = arith.constant 0 : i32
    %c0_i32_0 = arith.constant 0 : i32
    %c0_i32_1 = arith.constant 0 : i32
    return %arg0, %c0_i32, %c0_i32_0 : i32, i32, i32
  }
  func.func @transform_6(%arg0: i32) -> (i32, i32, i32) {
    %c0_i32 = arith.constant 0 : i32
    %c0_i32_0 = arith.constant 0 : i32
    %c0_i32_1 = arith.constant 0 : i32
    return %arg0, %c0_i32, %c0_i32_0 : i32, i32, i32
  }
  func.func @transform_7(%arg0: i32) -> (i32, i32, i32) {
    %c0_i32 = arith.constant 0 : i32
    %c0_i32_0 = arith.constant 0 : i32
    %c0_i32_1 = arith.constant 0 : i32
    return %arg0, %c0_i32, %c0_i32_0 : i32, i32, i32
  }
}

</mosaic_0001>

<llo_original>
// kernel: tpu_custom_call.1
$region0: #{tpu_custom_call.1}
  #allocation0 [shape = 'u32[]', space=smem, size = 0x4, offset = 0x4, fixed_abs, tag = 'smem constant byte address 0x4 - core index']
  #allocation1 [shape = 'u32[144,128]{1,0:T(1,128)}', space=vmem, size = 0x12000, scoped, tag = 'internal scratch']
  %s0 = inlined_call_operand.vmem [shape: f32[4,256], index: 0, kind: input, shape index: {}]
  %s1 = inlined_call_operand.vmem [shape: f32[4,1], index: 1, kind: input, shape index: {}]
  %s2 = inlined_call_operand.hbm [shape: f32[4,4], index: 2, kind: input, shape index: {}]
  %s3 = inlined_call_operand.vmem [shape: f32[4,1], index: 3, kind: input, shape index: {}]
  %s4 = inlined_call_operand.vmem [shape: f32[2,4,256], index: 4, kind: input, shape index: {}]
  %s5 = inlined_call_operand.hbm [shape: f32[2,4,256], index: 5, kind: input, shape index: {}]
  %s6 = inlined_call_operand.hbm [shape: f32[2,8,256], index: 6, kind: output, shape index: {0}]
  %s7 = inlined_call_operand.hbm [shape: f32[2,8,256], index: 7, kind: output, shape index: {1}]
  %8 = xla_tuple %s6, %s7
  %s9 = sld [smem:[#allocation0]]
  $region73: #{tpu_custom_call.1} parent=0
    _
  %s11 = ssub.s32 1, %s9
  %s12 = scalar_select 0, %s11, %s9
  $region1: #{tpu_custom_call.1} parent=0
    #allocation2 [shape = 'u8[2048]{0}', space=vmem, size = 0x800, scoped, tag = 'input window, operand 2, single buffered']
    #allocation3 [shape = 's32[2]{0}', space=sflag, size = 0x8, scoped, tag = 'scoped memory for tpu_custom_call.1']
    #allocation4 [shape = 's32[2]{0}', space=sflag, size = 0x8, scoped, tag = 'scoped memory for tpu_custom_call.1']
    #allocation5 [shape = 'u8[8192]{0}', space=vmem, size = 0x2000, scoped, tag = 'input window, operand 5']
    #allocation6 [shape = 's32[2]{0}', space=sflag, size = 0x8, scoped, tag = 'scoped memory for tpu_custom_call.1']
    #allocation7 [shape = 'u8[16384]{0}', space=vmem, size = 0x4000, scoped, tag = 'output window, operand 0']
    #allocation8 [shape = 'u8[16384]{0}', space=vmem, size = 0x4000, scoped, tag = 'output window, operand 1']
    #allocation9 [shape = 's32[2]{0}', space=sflag, size = 0x8, scoped, tag = 'scoped memory for tpu_custom_call.1']
    %13 = vsyncpa [#allocation3], 0
    %14 = vsyncpa [#allocation6], 0
    %s15 = scalar_lea.sflag [#allocation6], 1
    %16 = vsyncpa %s15, 0
    %17 = vsyncpa [#allocation4], 0
    %s18 = scalar_lea.sflag [#allocation4], 1
    %19 = vsyncpa %s18, 0
    %20 = vsyncpa [#allocation9], 0
    %s21 = scalar_lea.sflag [#allocation9], 1
    %22 = vsyncpa %s21, 0
    loop: start=0, step=1, limit=4
    $region2: #{tpu_custom_call.1} parent=1 // loop_pre_header
      _
    $region3: #{tpu_custom_call.1} parent=1 // loop_header
      %s24 = sphi 0, %s28
      %p25 = scmp.ge.s32.totalorder %s24, 4
      %s32 = sphi 0, %s32
      %s34 = sphi 0, %s32
      %s35 = sphi 0, %s34
      %s49 = sphi 0, %s35
      %s53 = sphi 0, %s53
      %s55 = sphi 0, %s53
      %s56 = sphi 0, %s55
      %s70 = sphi 0, %s56
      %s74 = sphi 0, %s74
      %s76 = sphi 0, %s74
      %s77 = sphi 0, %s76
      %s91 = sphi 0, %s77
      %s95 = sphi 0, %s95
      %s97 = sphi 0, %s95
      %s98 = sphi 0, %s97
      %s112 = sphi 0, %s98
      %s118 = sphi 0, %s120
      %s121 = sphi 0, %s118
      %s122 = sphi 0, %s121
      %s138 = sphi 0, %s122
      %s144 = sphi 0, %s146
      %s147 = sphi 0, %s144
      %s148 = sphi 0, %s147
      %s164 = sphi 0, %s148
      %s170 = sphi 0, %s172
      %s173 = sphi 0, %s170
      %s174 = sphi 0, %s173
      %s190 = sphi 0, %s174
      %s196 = sphi 0, %s198
      %s199 = sphi 0, %s196
      %s200 = sphi 0, %s199
      %s216 = sphi 0, %s200
    $region4: #{tpu_custom_call.1} parent=1 // loop_header_branch
      %27 = sbr.rel (%p25) target = $region8
    $region5: #{tpu_custom_call.1} parent=1 // loop_body
      %s29 = ssub.s32 %s24, 1
      %s30 = ssub.s32 %s24, 2
      %s31 = sadd.s32 %s24, 1
      %s33 = sadd.s32 %s32, 1
      %p36 = scmp.eq.s32.totalorder %s24, 1
      %p37 = scmp.ne.s32.totalorder %s32, %s34
      %p38 = scmp.eq.s32.totalorder %s24, 0
      %p39 = por %p37, %p38
      %p40 = scmp.ne.s32.totalorder %s32, %s34
      %p41 = scmp.eq.s32.totalorder %s29, 1
      %p42 = por %p40, %p41
      %p43 = scmp.ne.s32.totalorder %s34, %s35
      %p44 = scmp.eq.s32.totalorder %s29, 0
      %p45 = por %p43, %p44
      %p46 = scmp.ne.s32.totalorder %s34, %s35
      %p47 = scmp.eq.s32.totalorder %s30, 1
      %p48 = por %p46, %p47
      %p50 = scmp.ne.s32.totalorder %s35, %s49
      %p51 = scmp.eq.s32.totalorder %s30, 0
      %p52 = por %p50, %p51
      %s54 = sadd.s32 %s53, 1
      %p57 = scmp.eq.s32.totalorder %s24, 1
      %p58 = scmp.ne.s32.totalorder %s53, %s55
      %p59 = scmp.eq.s32.totalorder %s24, 0
      %p60 = por %p58, %p59
      %p61 = scmp.ne.s32.totalorder %s53, %s55
      %p62 = scmp.eq.s32.totalorder %s29, 1
      %p63 = por %p61, %p62
      %p64 = scmp.ne.s32.totalorder %s55, %s56
      %p65 = scmp.eq.s32.totalorder %s29, 0
      %p66 = por %p64, %p65
      %p67 = scmp.ne.s32.totalorder %s55, %s56
      %p68 = scmp.eq.s32.totalorder %s30, 1
      %p69 = por %p67, %p68
      %p71 = scmp.ne.s32.totalorder %s56, %s70
      %p72 = scmp.eq.s32.totalorder %s30, 0
      %p73 = por %p71, %p72
      %s75 = sadd.s32 %s74, 1
      %p78 = scmp.eq.s32.totalorder %s24, 1
      %p79 = scmp.ne.s32.totalorder %s74, %s76
      %p80 = scmp.eq.s32.totalorder %s24, 0
      %p81 = por %p79, %p80
      %p82 = scmp.ne.s32.totalorder %s74, %s76
      %p83 = scmp.eq.s32.totalorder %s29, 1
      %p84 = por %p82, %p83
      %p85 = scmp.ne.s32.totalorder %s76, %s77
      %p86 = scmp.eq.s32.totalorder %s29, 0
      %p87 = por %p85, %p86
      %p88 = scmp.ne.s32.totalorder %s76, %s77
      %p89 = scmp.eq.s32.totalorder %s30, 1
      %p90 = por %p88, %p89
      %p92 = scmp.ne.s32.totalorder %s77, %s91
      %p93 = scmp.eq.s32.totalorder %s30, 0
      %p94 = por %p92, %p93
      %s96 = sadd.s32 %s95, 1
      %p99 = scmp.eq.s32.totalorder %s24, 1
      %p100 = scmp.ne.s32.totalorder %s95, %s97
      %p101 = scmp.eq.s32.totalorder %s24, 0
      %p102 = por %p100, %p101
      %p103 = scmp.ne.s32.totalorder %s95, %s97
      %p104 = scmp.eq.s32.totalorder %s29, 1
      %p105 = por %p103, %p104
      %p106 = scmp.ne.s32.totalorder %s97, %s98
      %p107 = scmp.eq.s32.totalorder %s29, 0
      %p108 = por %p106, %p107
      %p109 = scmp.ne.s32.totalorder %s97, %s98
      %p110 = scmp.eq.s32.totalorder %s30, 1
      %p111 = por %p109, %p110
      %p113 = scmp.ne.s32.totalorder %s98, %s112
      %p114 = scmp.eq.s32.totalorder %s30, 0
      %p115 = por %p113, %p114
      %s116 = ssub.s32 %s24, %s31
      %p117 = scmp.eq.s32.totalorder %s116, 0
      %s119 = sadd.s32 %s118, 1
      %s120 = scalar_select %p117, %s118, %s119
      %p123 = pneg %p117
      %p124 = scmp.eq.s32.totalorder %s24, 1
      %p125 = por %p123, %p124
      %p126 = scmp.ne.s32.totalorder %s118, %s121
      %p127 = scmp.eq.s32.totalorder %s24, 0
      %p128 = por %p126, %p127
      %p129 = scmp.ne.s32.totalorder %s118, %s121
      %p130 = scmp.eq.s32.totalorder %s29, 1
      %p131 = por %p129, %p130
      %p132 = scmp.ne.s32.totalorder %s121, %s122
      %p133 = scmp.eq.s32.totalorder %s29, 0
      %p134 = por %p132, %p133
      %p135 = scmp.ne.s32.totalorder %s121, %s122
      %p136 = scmp.eq.s32.totalorder %s30, 1
      %p137 = por %p135, %p136
      %p139 = scmp.ne.s32.totalorder %s122, %s138
      %p140 = scmp.eq.s32.totalorder %s30, 0
      %p141 = por %p139, %p140
      %s142 = ssub.s32 %s24, %s31
      %p143 = scmp.eq.s32.totalorder %s142, 0
      %s145 = sadd.s32 %s144, 1
      %s146 = scalar_select %p143, %s144, %s145
      %p149 = pneg %p143
      %p150 = scmp.eq.s32.totalorder %s24, 1
      %p151 = por %p149, %p150
      %p152 = scmp.ne.s32.totalorder %s144, %s147
      %p153 = scmp.eq.s32.totalorder %s24, 0
      %p154 = por %p152, %p153
      %p155 = scmp.ne.s32.totalorder %s144, %s147
      %p156 = scmp.eq.s32.totalorder %s29, 1
      %p157 = por %p155, %p156
      %p158 = scmp.ne.s32.totalorder %s147, %s148
      %p159 = scmp.eq.s32.totalorder %s29, 0
      %p160 = por %p158, %p159
      %p161 = scmp.ne.s32.totalorder %s147, %s148
      %p162 = scmp.eq.s32.totalorder %s30, 1
      %p163 = por %p161, %p162
      %p165 = scmp.ne.s32.totalorder %s148, %s164
      %p166 = scmp.eq.s32.totalorder %s30, 0
      %p167 = por %p165, %p166
      %s168 = ssub.s32 %s24, %s31
      %p169 = scmp.eq.s32.totalorder %s168, 0
      %s171 = sadd.s32 %s170, 1
      %s172 = scalar_select %p169, %s170, %s171
      %p175 = pneg %p169
      %p176 = scmp.eq.s32.totalorder %s24, 1
      %p177 = por %p175, %p176
      %p178 = scmp.ne.s32.totalorder %s170, %s173
      %p179 = scmp.eq.s32.totalorder %s24, 0
      %p180 = por %p178, %p179
      %p181 = scmp.ne.s32.totalorder %s170, %s173
      %p182 = scmp.eq.s32.totalorder %s29, 1
      %p183 = por %p181, %p182
      %p184 = scmp.ne.s32.totalorder %s173, %s174
      %p185 = scmp.eq.s32.totalorder %s29, 0
      %p186 = por %p184, %p185
      %p187 = scmp.ne.s32.totalorder %s173, %s174
      %p188 = scmp.eq.s32.totalorder %s30, 1
      %p189 = por %p187, %p188
      %p191 = scmp.ne.s32.totalorder %s174, %s190
      %p192 = scmp.eq.s32.totalorder %s30, 0
      %p193 = por %p191, %p192
      %s194 = ssub.s32 %s24, %s31
      %p195 = scmp.eq.s32.totalorder %s194, 0
      %s197 = sadd.s32 %s196, 1
      %s198 = scalar_select %p195, %s196, %s197
      %p201 = pneg %p195
      %p202 = scmp.eq.s32.totalorder %s24, 1
      %p203 = por %p201, %p202
      %p204 = scmp.ne.s32.totalorder %s196, %s199
      %p205 = scmp.eq.s32.totalorder %s24, 0
      %p206 = por %p204, %p205
      %p207 = scmp.ne.s32.totalorder %s196, %s199
      %p208 = scmp.eq.s32.totalorder %s29, 1
      %p209 = por %p207, %p208
      %p210 = scmp.ne.s32.totalorder %s199, %s200
      %p211 = scmp.eq.s32.totalorder %s29, 0
      %p212 = por %p210, %p211
      %p213 = scmp.ne.s32.totalorder %s199, %s200
      %p214 = scmp.eq.s32.totalorder %s30, 1
      %p215 = por %p213, %p214
      %p217 = scmp.ne.s32.totalorder %s200, %s216
      %p218 = scmp.eq.s32.totalorder %s30, 0
      %p219 = por %p217, %p218
      %p220 = scmp.le.s32.totalorder 1, %s24
      %p221 = scmp.lt.s32.totalorder %s24, 3
      %p222 = pnand %p220, %p221
      %p223 = pneg %p222
      // Predicated region
      $region9: #{tpu_custom_call.1} parent=5 // pred_check
        _
      $region10: #{tpu_custom_call.1} parent=5 // pred_check_branch
        %225 = sbr.rel (%p222) target = $region12
      $region11: #{tpu_custom_call.1} parent=5 // pred_region
        %s226 = ssub.s32 %s24, 1
        // Predicated region
        $region13: #{tpu_custom_call.1} parent=11 // pred_check
          %p227 = pneg %p45
        $region14: #{tpu_custom_call.1} parent=11 // pred_check_branch
          %229 = sbr.rel (%p227) target = $region16
        $region15: #{tpu_custom_call.1} parent=11 // pred_region
          _
        $region16: #{tpu_custom_call.1} parent=11 // pred_fallthru
          _
        // Predicated region
        $region17: #{tpu_custom_call.1} parent=11 // pred_check
          %p230 = pneg %p66
        $region18: #{tpu_custom_call.1} parent=11 // pred_check_branch
          %232 = sbr.rel (%p230) target = $region20
        $region19: #{tpu_custom_call.1} parent=11 // pred_region
          _
        $region20: #{tpu_custom_call.1} parent=11 // pred_fallthru
          _
        // Predicated region
        $region21: #{tpu_custom_call.1} parent=11 // pred_check
          %p233 = pneg %p87
        $region22: #{tpu_custom_call.1} parent=11 // pred_check_branch
          %235 = sbr.rel (%p233) target = $region24
        $region23: #{tpu_custom_call.1} parent=11 // pred_region
          %s237 = ssub.s32 64, 64
          %238 = vsyncadd [#allocation3], %s237
          %s240 = sshll.u32 [#allocation2], 4
          %s241 = int_to_ptr.vmem [resolvable:$true] %s240
          %243 = dma.hbm_to_vmem [thread:$0]  %s2, 64, %s241, [#allocation3]
        $region24: #{tpu_custom_call.1} parent=11 // pred_fallthru
          _
        // Predicated region
        $region25: #{tpu_custom_call.1} parent=11 // pred_check
          %p244 = pneg %p108
        $region26: #{tpu_custom_call.1} parent=11 // pred_check_branch
          %246 = sbr.rel (%p244) target = $region28
        $region27: #{tpu_custom_call.1} parent=11 // pred_region
          _
        $region28: #{tpu_custom_call.1} parent=11 // pred_fallthru
          _
      $region12: #{tpu_custom_call.1} parent=5 // pred_fallthru
        _
      %p247 = scmp.lt.s32.totalorder %s24, 2
      // Predicated region
      $region29: #{tpu_custom_call.1} parent=5 // pred_check
        %p248 = pneg %p247
      $region30: #{tpu_custom_call.1} parent=5 // pred_check_branch
        %250 = sbr.rel (%p248) target = $region32
      $region31: #{tpu_custom_call.1} parent=5 // pred_region
        // Predicated region
        $region33: #{tpu_custom_call.1} parent=31 // pred_check
          %p251 = pneg %p128
        $region34: #{tpu_custom_call.1} parent=31 // pred_check_branch
          %253 = sbr.rel (%p251) target = $region36
        $region35: #{tpu_custom_call.1} parent=31 // pred_region
          %p254 = scmp.lt.s32.totalorder %s24, 1
          %s255 = scalar_select %p254, %s24, 1
          %s256 = smul.addr %s255, 2
          %s257 = smul.addr %s256, 4
          %s258 = scalar_lea.vmem %s4, %s257
        $region36: #{tpu_custom_call.1} parent=31 // pred_fallthru
          _
        // Predicated region
        $region37: #{tpu_custom_call.1} parent=31 // pred_check
          %p259 = pneg %p154
        $region38: #{tpu_custom_call.1} parent=31 // pred_check_branch
          %261 = sbr.rel (%p259) target = $region40
        $region39: #{tpu_custom_call.1} parent=31 // pred_region
          %s262 = sand.u32 %s144, 1
          %s263 = scalar_lea.sflag [#allocation6], %s262
          %s264 = sand.u32 %s144, 1
          %s265 = smul.addr %s264, 8
          %s266 = scalar_lea.vmem [#allocation5], %s265
          %s268 = ssub.s32 128, 128
          %269 = vsyncadd %s263, %s268
          %s270 = smul.addr %s24, 2
          %s271 = smul.addr %s270, 64
          %s272 = scalar_lea.hbm %s5, %s271
          %s274 = sshll.u32 %s266, 4
          %s275 = int_to_ptr.vmem [resolvable:$true] %s274
          %277 = dma.hbm_to_vmem [thread:$0]  %s272, 128, %s275, %s263
        $region40: #{tpu_custom_call.1} parent=31 // pred_fallthru
          _
      $region32: #{tpu_custom_call.1} parent=5 // pred_fallthru
        _
      %p278 = scmp.le.s32.totalorder 1, %s24
      %p279 = scmp.lt.s32.totalorder %s24, 3
      %p280 = pnand %p278, %p279
      %p281 = pneg %p280
      // Predicated region
      $region41: #{tpu_custom_call.1} parent=5 // pred_check
        _
      $region42: #{tpu_custom_call.1} parent=5 // pred_check_branch
        %283 = sbr.rel (%p280) target = $region44
      $region43: #{tpu_custom_call.1} parent=5 // pred_region
        %s284 = ssub.s32 %s24, 1
        // Predicated region
        $region45: #{tpu_custom_call.1} parent=43 // pred_check
          %p285 = pneg %p87
        $region46: #{tpu_custom_call.1} parent=43 // pred_check_branch
          %287 = sbr.rel (%p285) target = $region48
        $region47: #{tpu_custom_call.1} parent=43 // pred_region
          %288 = dma.done [#allocation3], 64
        $region48: #{tpu_custom_call.1} parent=43 // pred_fallthru
          _
        %s289 = sand.u32 %s147, 1
        %s290 = scalar_lea.sflag [#allocation6], %s289
        %s291 = sand.u32 %s147, 1
        %s292 = smul.addr %s291, 8
        %s293 = scalar_lea.vmem [#allocation5], %s292
        // Predicated region
        $region49: #{tpu_custom_call.1} parent=43 // pred_check
          %p294 = pneg %p160
        $region50: #{tpu_custom_call.1} parent=43 // pred_check_branch
          %296 = sbr.rel (%p294) target = $region52
        $region51: #{tpu_custom_call.1} parent=43 // pred_region
          %297 = dma.done %s290, 128
        $region52: #{tpu_custom_call.1} parent=43 // pred_fallthru
          _
        %p298 = pneg %p45
        %p299 = pneg %p42
        %p300 = pneg %p66
        %p301 = pneg %p63
        %p302 = pneg %p87
        %p303 = pneg %p84
        %p304 = pneg %p108
        %p305 = pneg %p105
        %p306 = scmp.lt.s32.totalorder %s29, 1
        %s307 = scalar_select %p306, %s29, 1
        %s308 = smul.addr %s307, 2
        %s309 = smul.addr %s308, 4
        %s310 = scalar_lea.vmem %s4, %s309
        %p311 = pneg %p134
        %p312 = pneg %p131
        %s313 = sand.u32 %s147, 1
        %s314 = scalar_lea.sflag [#allocation6], %s313
        %s315 = sand.u32 %s147, 1
        %s316 = smul.addr %s315, 8
        %s317 = scalar_lea.vmem [#allocation5], %s316
        %p318 = pneg %p160
        %p319 = pneg %p157
        %p320 = pneg %p186
        %p321 = pneg %p183
        %s322 = sand.u32 %s173, 1
        %s323 = scalar_lea.sflag [#allocation4], %s322
        %s324 = sand.u32 %s173, 1
        %s325 = smul.addr %s324, 16
        %s326 = scalar_lea.vmem [#allocation7], %s325
        %p327 = pneg %p212
        %p328 = pneg %p209
        %s329 = sand.u32 %s199, 1
        %s330 = scalar_lea.sflag [#allocation9], %s329
        %s331 = sand.u32 %s199, 1
        %s332 = smul.addr %s331, 16
        %s333 = scalar_lea.vmem [#allocation8], %s332
        %p334 = scmp.lt.s32.totalorder %s29, 1
        %s335 = scalar_select %p334, %s29, 1
        %s336 = smul.addr %s335, 2
        %s337 = smul.addr %s336, 4
        %s338 = scalar_lea.vmem %s4, %s337
        %v339 = vld [vmem:[%s338] sm:$0xff]
        %v340 = vld [vmem:[%s293] sm:$0xff]
        %v341 = vld [vmem:[%s0] sm:$0xff]
        %v342 = vmul.f32 %v339, %v341
        %v344 = vcombine.high %v342, %v342
        %vm346 = vcmask 1043456
        %v347 = vsel %vm346, %v342, 0.0
        %v348 = vsel %vm346, %v344, 0.0
        %v349 = vadd.f32 %v347, %v348
        %350 = vadd.xlane.f32.xlu0 %v349
        %v351 = vpop.xlane.xlu0 %350
        %v352 = vld [vmem:[%s1] sm:$0xf]
        %v353 = vadd.f32 %v351, %v352
        %vm354 = vcmask 3072
        %v355 = vsel %vm354, %v353, -inf
        %v356 = vrot.slane %v355, 4
        %v357 = vmax.f32 %v355, %v356
        %v358 = vrot.slane %v357, 2
        %v359 = vmax.f32 %v357, %v358
        %v360 = vrot.slane %v359, 1
        %v361 = vmax.f32 %v359, %v360
        %v362 = vsub.f32 %v353, %v361
        %v363 = vmul.f32 %v362, 1.442695
        %v364 = vpow.pop %v363
        %v365 = vsel %vm354, %v364, 0.0
        %v366 = vrot.slane %v365, 4
        %v367 = vadd.f32 %v365, %v366
        %v368 = vrot.slane %v367, 2
        %v369 = vadd.f32 %v367, %v368
        %v370 = vrot.slane %v369, 1
        %v371 = vadd.f32 %v369, %v370
        %v372 = vrcp.pop %v371
        %v373 = vmul.f32 %v364, %v372
        %375 = vset.pattern.permute.xlu0 0
        %376 = vperm.xlu0 %375, %v373
        %v377 = vpop.permute.xlu0 %376
        %v379 = vunpack.c.l.s4 839922192
        %v380 = vunpack.c.0.s8 %v379
        %v381 = vlaneseq
        %v382 = vshrl.u32 %v381, 7
        %v383 = vsub.s32 %v380, %v382
        %v384 = vrot.slane %v377, %v383
        %v386 = vmul.f32 %v340, %v384
        %v387 = vld [vmem:[#allocation2] sm:$0xf]
        %v388 = vld [vmem:[%s3] sm:$0xf]
        %390 = vset.pattern.permute.xlu0 0
        %391 = vperm.xlu0 %390, %v388
        %v392 = vpop.permute.xlu0 %391
        %395 = vset.pattern.permute.xlu0 0
        %396 = vperm.xlu0 %395, %v387
        %v397 = vpop.permute.xlu0 %396
        %v400 = vlaneseq
        %v401 = vshrl.u32 %v400, 7
        %v402 = vsub.s32 0, %v401
        %v403 = vrot.slane %v340, %v402
        %v404 = vlaneseq
        %v405 = vshrl.u32 %v404, 7
        %v406 = vsub.s32 4, %v405
        %v407 = vrot.slane %v340, %v406
        %v410 = vlaneseq
        %v411 = vshrl.u32 %v410, 7
        %v412 = vsub.s32 0, %v411
        %v413 = vrot.slane %v403, %v412
        %v414 = vlaneseq
        %v415 = vshrl.u32 %v414, 7
        %v416 = vsub.s32 0, %v415
        %v417 = vrot.slane %v407, %v416
        %v418 = vmul.f32 %v397, %v413
        %v419 = vmul.f32 %v397, %v417
        %v420 = vadd.f32 %v392, %v418
        %v421 = vadd.f32 %v392, %v419
        %422 = vset.pattern.permute.xlu0 1
        %423 = vperm.xlu0 %422, %v387
        %v424 = vpop.permute.xlu0 %423
        %v426 = vlaneseq
        %v427 = vshrl.u32 %v426, 7
        %v428 = vsub.s32 1, %v427
        %v429 = vrot.slane %v340, %v428
        %v430 = vlaneseq
        %v431 = vshrl.u32 %v430, 7
        %v432 = vsub.s32 5, %v431
        %v433 = vrot.slane %v340, %v432
        %v436 = vlaneseq
        %v437 = vshrl.u32 %v436, 7
        %v438 = vsub.s32 1, %v437
        %v439 = vrot.slane %v429, %v438
        %v440 = vlaneseq
        %v441 = vshrl.u32 %v440, 7
        %v442 = vsub.s32 1, %v441
        %v443 = vrot.slane %v433, %v442
        %v444 = vmul.f32 %v424, %v439
        %v445 = vmul.f32 %v424, %v443
        %v446 = vadd.f32 %v420, %v444
        %v447 = vadd.f32 %v421, %v445
        %448 = vset.pattern.permute.xlu0 2
        %449 = vperm.xlu0 %448, %v387
        %v450 = vpop.permute.xlu0 %449
        %v452 = vlaneseq
        %v453 = vshrl.u32 %v452, 7
        %v454 = vsub.s32 2, %v453
        %v455 = vrot.slane %v340, %v454
        %v456 = vlaneseq
        %v457 = vshrl.u32 %v456, 7
        %v458 = vsub.s32 6, %v457
        %v459 = vrot.slane %v340, %v458
        %v462 = vlaneseq
        %v463 = vshrl.u32 %v462, 7
        %v464 = vsub.s32 2, %v463
        %v465 = vrot.slane %v455, %v464
        %v466 = vlaneseq
        %v467 = vshrl.u32 %v466, 7
        %v468 = vsub.s32 2, %v467
        %v469 = vrot.slane %v459, %v468
        %v470 = vmul.f32 %v450, %v465
        %v471 = vmul.f32 %v450, %v469
        %v472 = vadd.f32 %v446, %v470
        %v473 = vadd.f32 %v447, %v471
        %474 = vset.pattern.permute.xlu0 3
        %475 = vperm.xlu0 %474, %v387
        %v476 = vpop.permute.xlu0 %475
        %v478 = vlaneseq
        %v479 = vshrl.u32 %v478, 7
        %v480 = vsub.s32 3, %v479
        %v481 = vrot.slane %v340, %v480
        %v482 = vlaneseq
        %v483 = vshrl.u32 %v482, 7
        %v484 = vsub.s32 7, %v483
        %v485 = vrot.slane %v340, %v484
        %v488 = vlaneseq
        %v489 = vshrl.u32 %v488, 7
        %v490 = vsub.s32 3, %v489
        %v491 = vrot.slane %v481, %v490
        %v492 = vlaneseq
        %v493 = vshrl.u32 %v492, 7
        %v494 = vsub.s32 3, %v493
        %v495 = vrot.slane %v485, %v494
        %v496 = vmul.f32 %v476, %v491
        %v497 = vmul.f32 %v476, %v495
        %v498 = vadd.f32 %v472, %v496
        %v499 = vadd.f32 %v473, %v497
        %v500 = vmax.f32 %v498, 0.0
        %v501 = vmax.f32 %v499, 0.0
        %v502 = vsub.f32 0.0, %v500
        %v503 = vsub.f32 0.0, %v501
        %v504 = vmul.f32 %v502, 1.442695
        %v505 = vpow.pop %v504
        %v506 = vmul.f32 %v503, 1.442695
        %v507 = vpow.pop %v506
        %v508 = vadd.f32 %v505, 1.0
        %v509 = vadd.f32 %v507, 1.0
        %v510 = vrcp.pop %v508
        %v511 = vmul.f32 1.0, %v510
        %v512 = vrcp.pop %v509
        %v513 = vmul.f32 1.0, %v512
        %v516 = vcombine.low %v511, %v513
        %v518 = vmul.f32 %v339, %v516
        %v520 = vcombine.high %v339, %v339
        %522 = vst [vmem:[%s326] sm:$0xf] %v339
        %523 = vst [vmem:[%s326 + $0x8] sm:$0xf] %v520
        %v525 = vcombine.low %v386, %v386
        %527 = vst [vmem:[%s326] sm:$0xf0] %v525
        %528 = vst [vmem:[%s326 + $0x8] sm:$0xf0] %v386
        %v529 = vcombine.high %v340, %v340
        %531 = vst [vmem:[%s333] sm:$0xf] %v340
        %532 = vst [vmem:[%s333 + $0x8] sm:$0xf] %v529
        %v534 = vcombine.low %v518, %v518
        %536 = vst [vmem:[%s333] sm:$0xf0] %v534
        %537 = vst [vmem:[%s333 + $0x8] sm:$0xf0] %v518
        %s538 = sand.u32 %s173, 1
        %s539 = scalar_lea.sflag [#allocation4], %s538
        %s540 = sand.u32 %s173, 1
        %s541 = smul.addr %s540, 16
        %s542 = scalar_lea.vmem [#allocation7], %s541
        %s543 = sand.u32 %s199, 1
        %s544 = scalar_lea.sflag [#allocation9], %s543
        %s545 = sand.u32 %s199, 1
        %s546 = smul.addr %s545, 16
        %s547 = scalar_lea.vmem [#allocation8], %s546
        // Predicated region
        $region53: #{tpu_custom_call.1} parent=43 // pred_check
          %p548 = pneg %p183
        $region54: #{tpu_custom_call.1} parent=43 // pred_check_branch
          %550 = sbr.rel (%p548) target = $region56
        $region55: #{tpu_custom_call.1} parent=43 // pred_region
          %s552 = ssub.s32 256, 256
          %553 = vsyncadd %s539, %s552
          %s554 = smul.addr %s29, 2
          %s555 = smul.addr %s554, 128
          %s556 = scalar_lea.hbm %s6, %s555
          %s558 = sshll.u32 %s542, 4
          %s559 = int_to_ptr.vmem [resolvable:$true] %s558
          %561 = dma.vmem_to_hbm [thread:$0]  %s559, 256, %s556, %s539
        $region56: #{tpu_custom_call.1} parent=43 // pred_fallthru
          _
        // Predicated region
        $region57: #{tpu_custom_call.1} parent=43 // pred_check
          %p562 = pneg %p209
        $region58: #{tpu_custom_call.1} parent=43 // pred_check_branch
          %564 = sbr.rel (%p562) target = $region60
        $region59: #{tpu_custom_call.1} parent=43 // pred_region
          %s566 = ssub.s32 256, 256
          %567 = vsyncadd %s544, %s566
          %s568 = smul.addr %s29, 2
          %s569 = smul.addr %s568, 128
          %s570 = scalar_lea.hbm %s7, %s569
          %s572 = sshll.u32 %s547, 4
          %s573 = int_to_ptr.vmem [resolvable:$true] %s572
          %575 = dma.vmem_to_hbm [thread:$0]  %s573, 256, %s570, %s544
        $region60: #{tpu_custom_call.1} parent=43 // pred_fallthru
          _
      $region44: #{tpu_custom_call.1} parent=5 // pred_fallthru
        _
      %p576 = scmp.le.s32.totalorder 2, %s24
      // Predicated region
      $region61: #{tpu_custom_call.1} parent=5 // pred_check
        %p577 = pneg %p576
      $region62: #{tpu_custom_call.1} parent=5 // pred_check_branch
        %579 = sbr.rel (%p577) target = $region64
      $region63: #{tpu_custom_call.1} parent=5 // pred_region
        %s580 = ssub.s32 %s24, 2
        // Predicated region
        $region65: #{tpu_custom_call.1} parent=63 // pred_check
          %p581 = pneg %p189
        $region66: #{tpu_custom_call.1} parent=63 // pred_check_branch
          %583 = sbr.rel (%p581) target = $region68
        $region67: #{tpu_custom_call.1} parent=63 // pred_region
          %s584 = sand.u32 %s174, 1
          %s585 = scalar_lea.sflag [#allocation4], %s584
          %s586 = sand.u32 %s174, 1
          %s587 = smul.addr %s586, 16
          %s588 = scalar_lea.vmem [#allocation7], %s587
          %589 = dma.done %s585, 256
        $region68: #{tpu_custom_call.1} parent=63 // pred_fallthru
          _
        // Predicated region
        $region69: #{tpu_custom_call.1} parent=63 // pred_check
          %p590 = pneg %p215
        $region70: #{tpu_custom_call.1} parent=63 // pred_check_branch
          %592 = sbr.rel (%p590) target = $region72
        $region71: #{tpu_custom_call.1} parent=63 // pred_region
          %s593 = sand.u32 %s200, 1
          %s594 = scalar_lea.sflag [#allocation9], %s593
          %s595 = sand.u32 %s200, 1
          %s596 = smul.addr %s595, 16
          %s597 = scalar_lea.vmem [#allocation8], %s596
          %598 = dma.done %s594, 256
        $region72: #{tpu_custom_call.1} parent=63 // pred_fallthru
          _
      $region64: #{tpu_custom_call.1} parent=5 // pred_fallthru
        _
    $region6: #{tpu_custom_call.1} parent=1 // loop_footer
      %s28 = sadd.s32 1, %s24
    $region7: #{tpu_custom_call.1} parent=1 // loop_footer_branch
      %23 = sbr.rel target = $region3
    $region8: #{tpu_custom_call.1} parent=1 // loop_exit
      _
    %599 = vsyncpa [#allocation3], 1
    %s600 = scalar_lea.sflag [#allocation3], 1
    %601 = vsyncpa %s600, 1
    %602 = vsyncpa [#allocation6], 1
    %s603 = scalar_lea.sflag [#allocation6], 1
    %604 = vsyncpa %s603, 1
    %605 = vsyncpa [#allocation4], 1
    %s606 = scalar_lea.sflag [#allocation4], 1
    %607 = vsyncpa %s606, 1
    %608 = vsyncpa [#allocation9], 1
    %s609 = scalar_lea.sflag [#allocation9], 1
    %610 = vsyncpa %s609, 1

</llo_original>
